<compile_context>
chip_gen: v7x
topology: tpu7x:2x2x1
jax: 0.10.0
libtpu: 0.0.40
codegen_flags: <defaults>
</compile_context>

<pallas_src>
import functools

import jax
import jax.numpy as jnp
from jax import lax
from jax.experimental import pallas as pl
from jax.experimental.pallas import tpu as pltpu

LANE = 128
SUBLANE = 8
VMEM_BUDGET_BYTES = 32 * 1024 * 1024   # <= ~half of v7x's 64 MiB physical VMEM


def _round_up(x, m):
    return ((x + m - 1) // m) * m


def _cdiv(a, b):
    return (a + b - 1) // b


def encoder_kernel(x_ref, w_ref, out_ref, acc_ref, *, n_cat):
    """One (batch-tile i, K-tile k) grid step.

    x_ref:   (TB, TK)     streamed activation tile (bf16)
    w_ref:   (TK, C_pad)  pre-transposed weight tile (K on sublanes, N on lanes)
    out_ref: (TB, C_pad)  f32 log-probabilities (resident across the K axis)
    acc_ref: (TB, C_pad)  f32 logit accumulator (VMEM scratch)
    """
    k = pl.program_id(1)

    @pl.when(k == 0)
    def _():
        acc_ref[...] = jnp.zeros_like(acc_ref)

    # Standard MXU layout: contract x's last dim against w's first dim
    # (weight already transposed in the wrapper) -> no in-kernel transpose.
    acc_ref[...] += jnp.dot(x_ref[...], w_ref[...],
                            preferred_element_type=jnp.float32)

    @pl.when(k == pl.num_programs(1) - 1)
    def _():
        logits = acc_ref[...]
        c_pad = logits.shape[1]
        if n_cat < c_pad:
            # Mask padded class columns to -inf so they contribute neither to
            # the row max nor to the softmax normalizer (exp(-inf) == 0).
            col = lax.broadcasted_iota(jnp.int32, logits.shape, 1)
            logits = jnp.where(col < n_cat, logits, jnp.float32(-jnp.inf))
        # Numerically stable log_softmax over dim=1 (class axis), f32 math.
        m = jnp.max(logits, axis=1, keepdims=True)
        shifted = logits - m
        lse = jnp.log(jnp.sum(jnp.exp(shifted), axis=1, keepdims=True))
        out_ref[...] = (shifted - lse).astype(out_ref.dtype)


def encoder_forward(x_nchw, w, *, compute_dtype=jnp.bfloat16,
                    tb_max=2048, tk_max=2048):
    """x_nchw: [B, C_in, H, W]; w: [n_cat, C_in*H*W] (lin_out.weight, no bias).

    Returns log_softmax(x.flatten(1) @ w.T, axis=1) with shape [B, n_cat], f32.
    """
    B = x_nchw.shape[0]
    D = 1
    for s in x_nchw.shape[1:]:
        D *= s
    C = w.shape[0]
    C_pad = _round_up(C, LANE)
    in_itemsize = jnp.dtype(compute_dtype).itemsize

    # ---- K (reduction over D) tiling ----------------------------------------
    if D <= tk_max:
        TK, D_pad = D, D                       # single K step, full-extent block
    else:
        TK = _round_up(min(tk_max, D), LANE)   # multiple of 128: valid lane dim
        D_pad = _round_up(D, TK)               # for x and sublane dim for w_t
    n_k = D_pad // TK

    # ---- VMEM-budgeted batch tile --------------------------------------------
    # Per step: 2x (TB,TK) x-tile + 2x (TK,C_pad) w-tile + 2x (TB,C_pad) f32
    # output block + 1x (TB,C_pad) f32 accumulator scratch.
    fixed_bytes = 2 * TK * C_pad * in_itemsize
    per_row_bytes = 2 * TK * in_itemsize + 3 * C_pad * 4
    tb_budget = (VMEM_BUDGET_BYTES - fixed_bytes) // per_row_bytes
    tb_budget = max((min(tb_budget, tb_max) // SUBLANE) * SUBLANE, SUBLANE)

    # Balanced batch tiles (avoid padding B up to a fixed multiple of tb_max);
    # keep at least 2 grid steps when B allows, so v7x's 2 TensorCores both get
    # work via dimension_semantics=("parallel", ...).  Cost on v5e/v6e: one
    # extra ~0.35 us grid step — negligible.
    B8 = _round_up(B, SUBLANE)
    n_b = max(_cdiv(B8, tb_budget), 1)
    if B8 >= 2 * SUBLANE:
        n_b = max(n_b, 2)
    TB = _round_up(_cdiv(B8, n_b), SUBLANE)
    B_pad = n_b * TB

    # ---- Glue (outside the kernel): flatten, cast, pad, pre-transpose w ------
    x_flat = x_nchw.reshape(B, D).astype(compute_dtype)   # torch flatten(1) order
    if (B_pad, D_pad) != (B, D):
        x_flat = jnp.pad(x_flat, ((0, B_pad - B), (0, D_pad - D)))
    # One-time XLA transpose to (D_pad, C_pad): zero-padded rows/cols are inert.
    w_t = jnp.pad(w.T.astype(compute_dtype), ((0, D_pad - D), (0, C_pad - C)))

    vmem_needed = 2 * TB * TK * in_itemsize + fixed_bytes + 3 * TB * C_pad * 4
    vmem_limit = int(min(max(vmem_needed + (8 << 20), 16 << 20), 48 << 20))

    cost = pl.CostEstimate(
        flops=2 * B_pad * D_pad * C_pad,
        transcendentals=B_pad * (C_pad + 1),      # exp per element + log per row
        bytes_accessed=(B_pad * D_pad * in_itemsize
                        + (n_b if n_k > 1 else 1) * D_pad * C_pad * in_itemsize
                        + B_pad * C_pad * 4),
    )

    out_pad = pl.pallas_call(
        functools.partial(encoder_kernel, n_cat=C),
        out_shape=jax.ShapeDtypeStruct((B_pad, C_pad), jnp.float32),
        grid_spec=pltpu.PrefetchScalarGridSpec(
            num_scalar_prefetch=0,
            grid=(n_b, n_k),                                  # K axis last
            in_specs=[
                pl.BlockSpec((TB, TK), lambda i, k: (i, k)),      # streamed x
                pl.BlockSpec((TK, C_pad), lambda i, k: (k, 0)),   # weight tiles
            ],
            out_specs=pl.BlockSpec((TB, C_pad), lambda i, k: (i, 0)),
            scratch_shapes=[pltpu.VMEM((TB, C_pad), jnp.float32)],
        ),
        compiler_params=pltpu.CompilerParams(
            dimension_semantics=("parallel", "arbitrary"),    # megacore + reduce
            vmem_limit_bytes=vmem_limit,
        ),
        cost_estimate=cost,
    )(x_flat, w_t)

    return out_pad[:B, :C]


def init_lin_out_weight(key, n_cat, in_features):
    # init_linear(..., init_gain_act='linear') ~ xavier-uniform with gain=1.0.
    bound = (6.0 / (in_features + n_cat)) ** 0.5
    return jax.random.uniform(
        key, (n_cat, in_features), dtype=jnp.float32, minval=-bound, maxval=bound
    )


if __name__ == "__main__":
    key = jax.random.PRNGKey(0)
    k_x, k_w = jax.random.split(key)

    # Small shapes consistent with the module defaults: batch=2, 1 input
    # channel, img_size=16, n_cat=8.  (At these demo shapes the call is pure
    # launch overhead; the tiling logic targets production batch sizes.)
    B, C_in, H, W = 2, 1, 16, 16
    n_cat = 8
    in_features = C_in * H * W

    x = jax.random.normal(k_x, (B, C_in, H, W), dtype=jnp.float32)
    w = init_lin_out_weight(k_w, n_cat, in_features)

    log_p = jax.block_until_ready(encoder_forward(x, w))

    # Reference with the same bf16 input rounding and f32 accumulation.
    xb = x.reshape(B, -1).astype(jnp.bfloat16).astype(jnp.float32)
    wb = w.astype(jnp.bfloat16).astype(jnp.float32)
    ref = jax.nn.log_softmax(xb @ wb.T, axis=1)

    assert log_p.shape == (B, n_cat)
    assert jnp.allclose(log_p, ref, atol=1e-4, rtol=1e-4)

    # Also exercise the K-tiled (reduction-over-D) accumulator path.
    log_p_k = jax.block_until_ready(encoder_forward(x, w, tk_max=128))
    assert jnp.allclose(log_p_k, ref, atol=1e-4, rtol=1e-4)

    print("KERNEL_OK")
</pallas_src>

<mosaic_0001>
module attributes {stable_mosaic.version = 11 : i64} {
  func.func @encoder_kernel(%arg0: i32, %arg1: i32, %arg2: memref<8x256xbf16, #tpu.memory_space<vmem>>, %arg3: memref<256x128xbf16, #tpu.memory_space<vmem>>, %arg4: memref<8x128xf32, #tpu.memory_space<vmem>>, %arg5: memref<8x128xf32, #tpu.memory_space<vmem>>) attributes {dimension_semantics = [#tpu.dimension_semantics<parallel>, #tpu.dimension_semantics<arbitrary>], iteration_bounds = array<i64: 1, 1>, scalar_prefetch = 0 : i64, scratch_operands = 1 : i64, tpu.core_type = #tpu.core_type<tc>, window_params = [{transform_indices = @transform_0, window_bounds = array<i64: 8, 256>}, {transform_indices = @transform_1, window_bounds = array<i64: 256, 128>}, {transform_indices = @transform_2, window_bounds = array<i64: 8, 128>}]} {
    %c0_i32 = arith.constant 0 : i32
    %0 = arith.cmpi eq, %arg1, %c0_i32 : i32
    %1 = arith.extui %0 : i1 to i32
    %c0_i32_0 = arith.constant 0 : i32
    %2 = arith.cmpi ne, %1, %c0_i32_0 : i32
    scf.if %2 {
      %cst_10 = arith.constant 0.000000e+00 : f32
      %12 = vector.broadcast %cst_10 : f32 to vector<8x128xf32>
      %c0_11 = arith.constant 0 : index
      %c0_12 = arith.constant 0 : index
      %13 = vector.load %arg5[%c0_11, %c0_12] : memref<8x128xf32, #tpu.memory_space<vmem>>, vector<8x128xf32>
      tpu.vector_store %arg5[%c0_11, %c0_12], %12 {strides = array<i32>} : memref<8x128xf32, #tpu.memory_space<vmem>>, vector<8x128xf32>,
    } else {
    }
    %c0 = arith.constant 0 : index
    %c0_1 = arith.constant 0 : index
    %3 = vector.load %arg5[%c0, %c0_1] : memref<8x128xf32, #tpu.memory_space<vmem>>, vector<8x128xf32>
    %c0_2 = arith.constant 0 : index
    %c0_3 = arith.constant 0 : index
    %4 = vector.load %arg2[%c0_2, %c0_3] : memref<8x256xbf16, #tpu.memory_space<vmem>>, vector<8x256xbf16>
    %c0_4 = arith.constant 0 : index
    %c0_5 = arith.constant 0 : index
    %5 = vector.load %arg3[%c0_4, %c0_5] : memref<256x128xbf16, #tpu.memory_space<vmem>>, vector<256x128xbf16>
    %cst = arith.constant dense<0.000000e+00> : vector<8x128xf32>
    %6 = tpu.matmul %4, %5, %cst {dimension_numbers = #tpu.dot_dimension_numbers<[1], [0], [0], [1], [0, 0, 1, 1], [], []>} : vector<8x256xbf16>, vector<256x128xbf16>, vector<8x128xf32> -> vector<8x128xf32>
    %7 = arith.addf %3, %6 : vector<8x128xf32>
    %c0_6 = arith.constant 0 : index
    %c0_7 = arith.constant 0 : index
    %8 = vector.load %arg5[%c0_6, %c0_7] : memref<8x128xf32, #tpu.memory_space<vmem>>, vector<8x128xf32>
    tpu.vector_store %arg5[%c0_6, %c0_7], %7 {strides = array<i32>} : memref<8x128xf32, #tpu.memory_space<vmem>>, vector<8x128xf32>,
    %c0_i32_8 = arith.constant 0 : i32
    %9 = arith.cmpi eq, %arg1, %c0_i32_8 : i32
    %10 = arith.extui %9 : i1 to i32
    %c0_i32_9 = arith.constant 0 : i32
    %11 = arith.cmpi ne, %10, %c0_i32_9 : i32
    scf.if %11 {
      %c0_10 = arith.constant 0 : index
      %c0_11 = arith.constant 0 : index
      %12 = vector.load %arg5[%c0_10, %c0_11] : memref<8x128xf32, #tpu.memory_space<vmem>>, vector<8x128xf32>
      %13 = tpu.iota {dimensions = array<i32: 1>} : vector<8x128xi32>
      %c8_i32 = arith.constant 8 : i32
      %14 = vector.broadcast %c8_i32 : i32 to vector<8x128xi32>
      %15 = arith.cmpi slt, %13, %14 : vector<8x128xi32>
      %cst_12 = arith.constant 0xFF800000 : f32
      %16 = vector.broadcast %cst_12 : f32 to vector<8x128xf32>
      %17 = arith.select %15, %12, %16 : vector<8x128xi1>, vector<8x128xf32>
      %cst_13 = arith.constant dense<0xFF800000> : vector<8xf32>
      %18 = vector.multi_reduction <maximumf>, %17, %cst_13 [1] : vector<8x128xf32> to vector<8xf32>
      %19 = vector.shape_cast %18 : vector<8xf32> to vector<8x1xf32>
      %20 = vector.broadcast %19 : vector<8x1xf32> to vector<8x128xf32>
      %21 = arith.subf %17, %20 : vector<8x128xf32>
      %22 = math.exp %21 : vector<8x128xf32>
      %cst_14 = arith.constant dense<0.000000e+00> : vector<8xf32>
      %23 = vector.multi_reduction <add>, %22, %cst_14 [1] : vector<8x128xf32> to vector<8xf32>
      %24 = vector.shape_cast %23 : vector<8xf32> to vector<8x1xf32>
      %25 = math.log %24 : vector<8x1xf32>
      %26 = vector.broadcast %25 : vector<8x1xf32> to vector<8x128xf32>
      %27 = arith.subf %21, %26 : vector<8x128xf32>
      %c0_15 = arith.constant 0 : index
      %c0_16 = arith.constant 0 : index
      %28 = vector.load %arg4[%c0_15, %c0_16] : memref<8x128xf32, #tpu.memory_space<vmem>>, vector<8x128xf32>
      tpu.vector_store %arg4[%c0_15, %c0_16], %27 {strides = array<i32>} : memref<8x128xf32, #tpu.memory_space<vmem>>, vector<8x128xf32>,
    } else {
    }
    return
  }
  func.func @transform_0(%arg0: i32, %arg1: i32) -> (i32, i32) {
    %c0_i32 = arith.constant 0 : i32
    return %arg0, %arg1 : i32, i32
  }
  func.func @transform_1(%arg0: i32, %arg1: i32) -> (i32, i32) {
    %c0_i32 = arith.constant 0 : i32
    %c0_i32_0 = arith.constant 0 : i32
    return %arg1, %c0_i32 : i32, i32
  }
  func.func @transform_2(%arg0: i32, %arg1: i32) -> (i32, i32) {
    %c0_i32 = arith.constant 0 : i32
    %c0_i32_0 = arith.constant 0 : i32
    return %arg0, %c0_i32 : i32, i32
  }
}

</mosaic_0001>

<llo_original>
// kernel: tpu_custom_call.1
$region0: #{tpu_custom_call.1}
  #allocation0 [shape = 'u32[]', space=smem, size = 0x4, offset = 0x4, fixed_abs, tag = 'smem constant byte address 0x4 - core index']
  #allocation1 [shape = 'u32[144,128]{1,0:T(1,128)}', space=vmem, size = 0x12000, scoped, tag = 'internal scratch']
  #allocation2 [shape = 'f32[8,128]{1,0:T(8,128)}', space=vmem, size = 0x1000, scoped, tag = 'scratch operand']
  %s0 = inlined_call_operand.hbm [shape: bf16[8,256], index: 0, kind: input, shape index: {}]
  %s1 = inlined_call_operand.hbm [shape: bf16[256,128], index: 1, kind: input, shape index: {}]
  %s2 = inlined_call_operand.hbm [shape: f32[8,128], index: 2, kind: output, shape index: {}]
  %s3 = sld [smem:[#allocation0]]
  $region34: #{tpu_custom_call.1} parent=0
    _
  %s5 = ssub.s32 1, %s3
  %s6 = scalar_select 0, %s5, %s3
  $region1: #{tpu_custom_call.1} parent=0
    #allocation3 [shape = 'u8[4096]{0}', space=vmem, size = 0x1000, scoped, tag = 'input window, operand 0, single buffered']
    #allocation4 [shape = 's32[1]{0}', space=sflag, size = 0x4, scoped, tag = 'scoped memory for tpu_custom_call.1']
    #allocation5 [shape = 's32[1]{0}', space=sflag, size = 0x4, scoped, tag = 'scoped memory for tpu_custom_call.1']
    #allocation6 [shape = 'u8[65536]{0}', space=vmem, size = 0x10000, scoped, tag = 'input window, operand 1, single buffered']
    #allocation7 [shape = 's32[1]{0}', space=sflag, size = 0x4, scoped, tag = 'scoped memory for tpu_custom_call.1']
    #allocation8 [shape = 'u8[4096]{0}', space=vmem, size = 0x1000, scoped, tag = 'output window, operand 0, single buffered']
    %7 = vsyncpa [#allocation4], 0
    %8 = vsyncpa [#allocation7], 0
    %9 = vsyncpa [#allocation5], 0
    // Predicated region
    $region2: #{tpu_custom_call.1} parent=1 // pred_check
      _
    $region3: #{tpu_custom_call.1} parent=1 // pred_check_branch
      %11 = sbr.rel (0) target = $region5
    $region4: #{tpu_custom_call.1} parent=1 // pred_region
      %s13 = ssub.s32 128, 128
      %14 = vsyncadd [#allocation4], %s13
      %s16 = sshll.u32 [#allocation3], 4
      %s17 = int_to_ptr.vmem [resolvable:$true] %s16
      %19 = dma.hbm_to_vmem [thread:$0]  %s0, 128, %s17, [#allocation4]
    $region5: #{tpu_custom_call.1} parent=1 // pred_fallthru
      _
    // Predicated region
    $region6: #{tpu_custom_call.1} parent=1 // pred_check
      _
    $region7: #{tpu_custom_call.1} parent=1 // pred_check_branch
      %21 = sbr.rel (0) target = $region9
    $region8: #{tpu_custom_call.1} parent=1 // pred_region
      %s23 = ssub.s32 2048, 2048
      %24 = vsyncadd [#allocation7], %s23
      %s25 = sshll.u32 [#allocation6], 4
      %s26 = int_to_ptr.vmem [resolvable:$true] %s25
      %31 = dma.hbm_to_vmem [thread:$0]  %s1, 2048, %s26, [#allocation7], 64, 64, 4
    $region9: #{tpu_custom_call.1} parent=1 // pred_fallthru
      _
    // Predicated region
    $region10: #{tpu_custom_call.1} parent=1 // pred_check
      _
    $region11: #{tpu_custom_call.1} parent=1 // pred_check_branch
      %33 = sbr.rel (0) target = $region13
    $region12: #{tpu_custom_call.1} parent=1 // pred_region
      %34 = dma.done [#allocation4], 128
    $region13: #{tpu_custom_call.1} parent=1 // pred_fallthru
      _
    // Predicated region
    $region14: #{tpu_custom_call.1} parent=1 // pred_check
      _
    $region15: #{tpu_custom_call.1} parent=1 // pred_check_branch
      %36 = sbr.rel (0) target = $region17
    $region16: #{tpu_custom_call.1} parent=1 // pred_region
      %37 = dma.done [#allocation7], 2048
    $region17: #{tpu_custom_call.1} parent=1 // pred_fallthru
      _
    %p39 = scmp.eq.s32.totalorder 0, 0
    // Predicated region
    $region18: #{tpu_custom_call.1} parent=1 // pred_check
      %p40 = pneg %p39
    $region19: #{tpu_custom_call.1} parent=1 // pred_check_branch
      %42 = sbr.rel (%p40) target = $region21
    $region20: #{tpu_custom_call.1} parent=1 // pred_region
      %43 = vst [vmem:[#allocation2] sm:$0xff] 0.0
    $region21: #{tpu_custom_call.1} parent=1 // pred_fallthru
      _
    %v44 = vld [vmem:[#allocation2] sm:$0xff]
    %v45 = vld [vmem:[#allocation3] sm:$0xff]
    %v46 = vld [vmem:[#allocation6] sm:$0xf]
    %v47 = vld [vmem:[#allocation6 + $0x4] sm:$0xf]
    %v48 = vld [vmem:[#allocation6 + $0x8] sm:$0xf]
    %v49 = vld [vmem:[#allocation6 + $0xc] sm:$0xf]
    %v50 = vld [vmem:[#allocation6 + $0x10] sm:$0xf]
    %v51 = vld [vmem:[#allocation6 + $0x14] sm:$0xf]
    %v52 = vld [vmem:[#allocation6 + $0x18] sm:$0xf]
    %v53 = vld [vmem:[#allocation6 + $0x1c] sm:$0xf]
    %v54 = vld [vmem:[#allocation6 + $0x20] sm:$0xf]
    %v55 = vld [vmem:[#allocation6 + $0x24] sm:$0xf]
    %v56 = vld [vmem:[#allocation6 + $0x28] sm:$0xf]
    %v57 = vld [vmem:[#allocation6 + $0x2c] sm:$0xf]
    %v58 = vld [vmem:[#allocation6 + $0x30] sm:$0xf]
    %v59 = vld [vmem:[#allocation6 + $0x34] sm:$0xf]
    %v60 = vld [vmem:[#allocation6 + $0x38] sm:$0xf]
    %v61 = vld [vmem:[#allocation6 + $0x3c] sm:$0xf]
    %v62 = vld [vmem:[#allocation6 + $0x40] sm:$0xf]
    %v63 = vld [vmem:[#allocation6 + $0x44] sm:$0xf]
    %v64 = vld [vmem:[#allocation6 + $0x48] sm:$0xf]
    %v65 = vld [vmem:[#allocation6 + $0x4c] sm:$0xf]
    %v66 = vld [vmem:[#allocation6 + $0x50] sm:$0xf]
    %v67 = vld [vmem:[#allocation6 + $0x54] sm:$0xf]
    %v68 = vld [vmem:[#allocation6 + $0x58] sm:$0xf]
    %v69 = vld [vmem:[#allocation6 + $0x5c] sm:$0xf]
    %v70 = vld [vmem:[#allocation6 + $0x60] sm:$0xf]
    %v71 = vld [vmem:[#allocation6 + $0x64] sm:$0xf]
    %v72 = vld [vmem:[#allocation6 + $0x68] sm:$0xf]
    %v73 = vld [vmem:[#allocation6 + $0x6c] sm:$0xf]
    %v74 = vld [vmem:[#allocation6 + $0x70] sm:$0xf]
    %v75 = vld [vmem:[#allocation6 + $0x74] sm:$0xf]
    %v76 = vld [vmem:[#allocation6 + $0x78] sm:$0xf]
    %v77 = vld [vmem:[#allocation6 + $0x7c] sm:$0xf]
    %v79 = vunpack.c.l.b16 %v45
    %v80 = vunpack.c.h.b16 %v45
    %v81 = vpack.c.b16 %v79, %v79
    %v82 = vpack.c.b16 %v80, %v80
    %v117 = vunpack.c.l.b16 %v46
    %v118 = vunpack.c.l.b16 %v47
    %v119 = vunpack.c.l.b16 %v48
    %v120 = vunpack.c.l.b16 %v49
    %v121 = vunpack.c.l.b16 %v50
    %v122 = vunpack.c.l.b16 %v51
    %v123 = vunpack.c.l.b16 %v52
    %v124 = vunpack.c.l.b16 %v53
    %v125 = vunpack.c.l.b16 %v54
    %v126 = vunpack.c.l.b16 %v55
    %v127 = vunpack.c.l.b16 %v56
    %v128 = vunpack.c.l.b16 %v57
    %v129 = vunpack.c.l.b16 %v58
    %v130 = vunpack.c.l.b16 %v59
    %v131 = vunpack.c.l.b16 %v60
    %v132 = vunpack.c.l.b16 %v61
    %v133 = vunpack.c.l.b16 %v62
    %v134 = vunpack.c.l.b16 %v63
    %v135 = vunpack.c.l.b16 %v64
    %v136 = vunpack.c.l.b16 %v65
    %v137 = vunpack.c.l.b16 %v66
    %v138 = vunpack.c.l.b16 %v67
    %v139 = vunpack.c.l.b16 %v68
    %v140 = vunpack.c.l.b16 %v69
    %v141 = vunpack.c.l.b16 %v70
    %v142 = vunpack.c.l.b16 %v71
    %v143 = vunpack.c.l.b16 %v72
    %v144 = vunpack.c.l.b16 %v73
    %v145 = vunpack.c.l.b16 %v74
    %v146 = vunpack.c.l.b16 %v75
    %v147 = vunpack.c.l.b16 %v76
    %v148 = vunpack.c.l.b16 %v77
    %v149 = vpack.c.b16 %v118, %v117
    %v150 = vpack.c.b16 %v120, %v119
    %v151 = vpack.c.b16 %v122, %v121
    %v152 = vpack.c.b16 %v124, %v123
    %v153 = vpack.c.b16 %v126, %v125
    %v154 = vpack.c.b16 %v128, %v127
    %v155 = vpack.c.b16 %v130, %v129
    %v156 = vpack.c.b16 %v132, %v131
    %v157 = vpack.c.b16 %v134, %v133
    %v158 = vpack.c.b16 %v136, %v135
    %v159 = vpack.c.b16 %v138, %v137
    %v160 = vpack.c.b16 %v140, %v139
    %v161 = vpack.c.b16 %v142, %v141
    %v162 = vpack.c.b16 %v144, %v143
    %v163 = vpack.c.b16 %v146, %v145
    %v164 = vpack.c.b16 %v148, %v147
    %181 = vmatprep.subr.bf16.mxu0 0
    %182 = vmatpush1.bf16.msra.mxu0 %v149
    %183 = vmatprep.subr.bf16.mxu0 0
    %184 = vmatpush1.bf16.msra.mxu0 %v150
    %185 = vmatprep.subr.bf16.mxu0 0
    %186 = vmatpush1.bf16.msra.mxu0 %v151
    %187 = vmatprep.subr.bf16.mxu0 0
    %188 = vmatpush1.bf16.msra.mxu0 %v152
    %189 = vmatprep.subr.bf16.mxu0 0
    %190 = vmatpush1.bf16.msra.mxu0 %v153
    %191 = vmatprep.subr.bf16.mxu0 0
    %192 = vmatpush1.bf16.msra.mxu0 %v154
    %193 = vmatprep.subr.bf16.mxu0 0
    %194 = vmatpush1.bf16.msra.mxu0 %v155
    %195 = vmatprep.subr.bf16.mxu0 0
    %196 = vmatpush1.bf16.msra.mxu0 %v156
    %197 = vmatprep.subr.bf16.mxu0 0
    %198 = vmatpush1.bf16.msra.mxu0 %v157
    %199 = vmatprep.subr.bf16.mxu0 0
    %200 = vmatpush1.bf16.msra.mxu0 %v158
    %201 = vmatprep.subr.bf16.mxu0 0
    %202 = vmatpush1.bf16.msra.mxu0 %v159
    %203 = vmatprep.subr.bf16.mxu0 0
    %204 = vmatpush1.bf16.msra.mxu0 %v160
    %205 = vmatprep.subr.bf16.mxu0 0
    %206 = vmatpush1.bf16.msra.mxu0 %v161
    %207 = vmatprep.subr.bf16.mxu0 0
    %208 = vmatpush1.bf16.msra.mxu0 %v162
    %209 = vmatprep.subr.bf16.mxu0 0
    %210 = vmatpush1.bf16.msra.mxu0 %v163
    %211 = vmatprep.subr.bf16.mxu0 0
    %212 = vmatpush1.bf16.msra.mxu0 %v164
    %213 = vmatprep.mubr.bf16.mxu0 %v82
    %214 = vmatmul.mubr.bf16.gmra.mrb[0].mxu0 %v81
    %v215 = vpop.f32.mrb[0].mxu0
    %v216 = vadd.f32 0.0, %v215
    %v217 = vpop.f32.mrb[0].mxu0
    %v218 = vpop.f32.mrb[0].mxu0
    %v219 = vpop.f32.mrb[0].mxu0
    %220 = vdwg.mxu0
    %v221 = vadd.f32 %v44, %v216
    %222 = vst [vmem:[#allocation2] sm:$0xff] %v221
    // Predicated region
    $region22: #{tpu_custom_call.1} parent=1 // pred_check
      %p223 = pneg %p39
    $region23: #{tpu_custom_call.1} parent=1 // pred_check_branch
      %225 = sbr.rel (%p223) target = $region25
    $region24: #{tpu_custom_call.1} parent=1 // pred_region
      %v226 = vld [vmem:[#allocation2] sm:$0xff]
      %v227 = vlaneseq
      %v228 = vand.u32 %v227, 127
      %vm229 = vcmp.lt.s32.totalorder %v228, 8
      %v230 = vsel %vm229, %v226, -inf
      %231 = vmax.xlane.f32.xlu0 %v230
      %v232 = vpop.xlane.xlu0 %231
      %v233 = vsub.f32 %v230, %v232
      %v234 = vmul.f32 %v233, 1.442695
      %v235 = vpow.pop %v234
      %236 = vadd.xlane.f32.xlu0 %v235
      %v237 = vpop.xlane.xlu0 %236
      %v238 = vlog2.pop %v237
      %v239 = vmul.f32 %v238, 0.6931472
      %v240 = vsub.f32 %v233, %v239
      %241 = vst [vmem:[#allocation8] sm:$0xff] %v240
    $region25: #{tpu_custom_call.1} parent=1 // pred_fallthru
      _
    // Predicated region
    $region26: #{tpu_custom_call.1} parent=1 // pred_check
      _
    $region27: #{tpu_custom_call.1} parent=1 // pred_check_branch
      %243 = sbr.rel (0) target = $region29
    $region28: #{tpu_custom_call.1} parent=1 // pred_region
      %s245 = ssub.s32 128, 128
      %246 = vsyncadd [#allocation5], %s245
      %s248 = sshll.u32 [#allocation8], 4
      %s249 = int_to_ptr.vmem [resolvable:$true] %s248
      %251 = dma.vmem_to_hbm [thread:$0]  %s249, 128, %s2, [#allocation5]
    $region29: #{tpu_custom_call.1} parent=1 // pred_fallthru
      _
    // Predicated region
    $region30: #{tpu_custom_call.1} parent=1 // pred_check
      _
    $region31: #{tpu_custom_call.1} parent=1 // pred_check_branch
      %253 = sbr.rel (0) target = $region33
    $region32: #{tpu_custom_call.1} parent=1 // pred_region
      %254 = dma.done [#allocation5], 128
    $region33: #{tpu_custom_call.1} parent=1 // pred_fallthru
      _
    %255 = vsyncpa [#allocation4], 1
    %256 = vsyncpa [#allocation7], 1
    %257 = vsyncpa [#allocation5], 1

</llo_original>
